<compile_context>
chip_gen: v7x
topology: tpu7x:2x2x1
jax: 0.10.0
libtpu: 0.0.40
codegen_flags: <defaults>
</compile_context>

<pallas_src>
import jax
import jax.numpy as jnp
from jax import lax
from jax.experimental import pallas as pl
from jax.experimental.pallas import tpu as pltpu

D_MODEL = 768
MAXLEN = 30
N_SEGMENTS = 2
VOCAB_SIZE = 4          # len({'[PAD]','[CLS]','[SEP]','[MASK]'})
LN_EPS = 1e-5           # torch.nn.LayerNorm default


def _round_up(x, m):
    return (x + m - 1) // m * m


def embedding_kernel(meta_ref, table_ref, gamma_ref, beta_ref, out_ref):
    # meta_ref  : (TR, 3) int32 — per row: [tok_idx, V + pos, V + S + seg],
    #             i.e. three disjoint indices into the combined table.
    # table_ref : (K, D) f32    — [tok_tab; pos_tab[:S]; seg_tab] stacked.
    # gamma_ref/beta_ref : (1, D) f32
    # out_ref   : (TR, D) f32
    K = table_ref.shape[0]
    TR = meta_ref.shape[0]

    tok_idx = meta_ref[:, 0:1]    # (TR, 1) int32
    pos_idx = meta_ref[:, 1:2]
    seg_idx = meta_ref[:, 2:3]

    # Multi-hot mask (exactly 3 ones per row, disjoint index ranges).
    col = lax.broadcasted_iota(jnp.int32, (TR, K), 1)
    hot = ((col == tok_idx) | (col == pos_idx) | (col == seg_idx)).astype(jnp.float32)

    # Gather + sum of the three embeddings in a single MXU matmul.
    acc = jnp.dot(hot, table_ref[...], preferred_element_type=jnp.float32)  # (TR, D)

    # LayerNorm over d_model (two-pass, biased variance like torch.nn.LayerNorm).
    inv_d = jnp.float32(1.0 / acc.shape[-1])
    mean = jnp.sum(acc, axis=-1, keepdims=True) * inv_d
    centered = acc - mean
    var = jnp.sum(centered * centered, axis=-1, keepdims=True) * inv_d
    normed = centered * lax.rsqrt(var + LN_EPS)
    out_ref[...] = normed * gamma_ref[...] + beta_ref[...]


def bert_embedding(x, seg, tok_tab, pos_tab, seg_tab, gamma, beta, *, block_rows=512):
    """x, seg: (B, S) int; returns (B, S, D) f32 matching the PyTorch module."""
    B, S = x.shape
    V, D = tok_tab.shape
    NSEG = seg_tab.shape[0]
    T = B * S

    # Combined embedding table, VMEM resident inside the kernel.
    table = jnp.concatenate([tok_tab, pos_tab[:S], seg_tab], axis=0)  # (K, D)
    K = V + S + NSEG

    # Pack [token id, V + position, V + S + segment] per flattened row.
    ids = x.reshape(T).astype(jnp.int32)
    segs = seg.reshape(T).astype(jnp.int32)
    poss = jnp.tile(jnp.arange(S, dtype=jnp.int32), B)
    meta = jnp.stack([ids, V + poss, V + S + segs], axis=1)          # (T, 3)

    # Row tile: large (default 512) to amortize per-step overhead; padded so
    # T_pad % TR == 0 and TR % 8 == 0 (handles S like 30 that aren't 8-aligned).
    TR = min(_round_up(block_rows, 8), _round_up(T, 8))
    T_pad = _round_up(T, TR)
    if T_pad > T:
        meta = jnp.pad(meta, ((0, T_pad - T), (0, 0)))               # padded rows -> garbage, sliced off

    gamma2 = gamma.reshape(1, D)
    beta2 = beta.reshape(1, D)

    out = pl.pallas_call(
        embedding_kernel,
        out_shape=jax.ShapeDtypeStruct((T_pad, D), jnp.float32),
        grid_spec=pltpu.PrefetchScalarGridSpec(
            num_scalar_prefetch=0,
            grid=(T_pad // TR,),
            in_specs=[
                pl.BlockSpec((TR, 3), lambda i: (i, 0)),     # packed indices
                pl.BlockSpec((K, D), lambda i: (0, 0)),      # combined table (resident)
                pl.BlockSpec((1, D), lambda i: (0, 0)),      # gamma
                pl.BlockSpec((1, D), lambda i: (0, 0)),      # beta
            ],
            out_specs=pl.BlockSpec((TR, D), lambda i: (i, 0)),
        ),
        compiler_params=pltpu.CompilerParams(
            dimension_semantics=("parallel",)),
    )(meta, table, gamma2, beta2)

    return out[:T].reshape(B, S, D)


def _reference(x, seg, tok_tab, pos_tab, seg_tab, gamma, beta):
    # Pure-JAX reference mirroring the PyTorch forward.
    S = x.shape[1]
    emb = tok_tab[x] + pos_tab[jnp.arange(S)][None, :, :] + seg_tab[seg]
    mean = jnp.mean(emb, axis=-1, keepdims=True)
    var = jnp.mean(jnp.square(emb - mean), axis=-1, keepdims=True)
    return (emb - mean) / jnp.sqrt(var + LN_EPS) * gamma + beta


if __name__ == "__main__":
    key = jax.random.PRNGKey(0)
    k_tok, k_pos, k_seg, k_x, k_s = jax.random.split(key, 5)

    # Parameters (torch.nn.Embedding ~ N(0,1); LayerNorm: ones/zeros).
    tok_tab = jax.random.normal(k_tok, (VOCAB_SIZE, D_MODEL), jnp.float32)
    pos_tab = jax.random.normal(k_pos, (MAXLEN, D_MODEL), jnp.float32)
    seg_tab = jax.random.normal(k_seg, (N_SEGMENTS, D_MODEL), jnp.float32)
    gamma = jnp.ones((D_MODEL,), jnp.float32)
    beta = jnp.zeros((D_MODEL,), jnp.float32)

    # (B, S, block_rows) configs: default tile, non-8-aligned S (=maxlen),
    # and a forced multi-step parallel grid.
    configs = [(2, 8, 512), (3, 30, 512), (4, 8, 16)]
    for B, S, br in configs:
        kx, ks = jax.random.split(jax.random.fold_in(k_x, B * 100 + S), 2)
        x = jax.random.randint(kx, (B, S), 0, VOCAB_SIZE, dtype=jnp.int32)
        sg = jax.random.randint(ks, (B, S), 0, N_SEGMENTS, dtype=jnp.int32)

        out = bert_embedding(x, sg, tok_tab, pos_tab, seg_tab, gamma, beta,
                             block_rows=br)
        out = jax.block_until_ready(out)
        ref = _reference(x, sg, tok_tab, pos_tab, seg_tab, gamma, beta)

        assert out.shape == (B, S, D_MODEL)
        assert jnp.allclose(out, ref, atol=1e-4, rtol=1e-4), \
            f"mismatch vs reference for B={B}, S={S}"

    print("KERNEL_OK")
</pallas_src>

<mosaic_0001>
module attributes {stable_mosaic.version = 11 : i64} {
  func.func @embedding_kernel(%arg0: i32, %arg1: memref<16x3xi32, #tpu.memory_space<vmem>>, %arg2: memref<14x768xf32, #tpu.memory_space<vmem>>, %arg3: memref<1x768xf32, #tpu.memory_space<vmem>>, %arg4: memref<1x768xf32, #tpu.memory_space<vmem>>, %arg5: memref<16x768xf32, #tpu.memory_space<vmem>>) attributes {dimension_semantics = [#tpu.dimension_semantics<parallel>], iteration_bounds = array<i64: 1>, scalar_prefetch = 0 : i64, scratch_operands = 0 : i64, tpu.core_type = #tpu.core_type<tc>, window_params = [{transform_indices = @transform_0, window_bounds = array<i64: 16, 3>}, {pipeline_mode = #tpu.pipeline_mode<synchronous>, transform_indices = @transform_1, window_bounds = array<i64: 14, 768>}, {pipeline_mode = #tpu.pipeline_mode<synchronous>, transform_indices = @transform_2, window_bounds = array<i64: 1, 768>}, {pipeline_mode = #tpu.pipeline_mode<synchronous>, transform_indices = @transform_3, window_bounds = array<i64: 1, 768>}, {transform_indices = @transform_4, window_bounds = array<i64: 16, 768>}]} {
    %c0 = arith.constant 0 : index
    %c0_0 = arith.constant 0 : index
    %0 = vector.load %arg1[%c0, %c0_0] : memref<16x3xi32, #tpu.memory_space<vmem>>, vector<16x1xi32>
    %c0_1 = arith.constant 0 : index
    %c1 = arith.constant 1 : index
    %1 = vector.load %arg1[%c0_1, %c1] : memref<16x3xi32, #tpu.memory_space<vmem>>, vector<16x1xi32>
    %c0_2 = arith.constant 0 : index
    %c2 = arith.constant 2 : index
    %2 = vector.load %arg1[%c0_2, %c2] : memref<16x3xi32, #tpu.memory_space<vmem>>, vector<16x1xi32>
    %3 = tpu.iota {dimensions = array<i32: 1>} : vector<16x14xi32>
    %4 = vector.broadcast %0 : vector<16x1xi32> to vector<16x14xi32>
    %5 = arith.cmpi eq, %3, %4 : vector<16x14xi32>
    %6 = vector.broadcast %1 : vector<16x1xi32> to vector<16x14xi32>
    %7 = arith.cmpi eq, %3, %6 : vector<16x14xi32>
    %8 = arith.ori %5, %7 : vector<16x14xi1>
    %9 = vector.broadcast %2 : vector<16x1xi32> to vector<16x14xi32>
    %10 = arith.cmpi eq, %3, %9 : vector<16x14xi32>
    %11 = arith.ori %8, %10 : vector<16x14xi1>
    %12 = arith.extui %11 : vector<16x14xi1> to vector<16x14xi32>
    %13 = arith.sitofp %12 : vector<16x14xi32> to vector<16x14xf32>
    %c0_3 = arith.constant 0 : index
    %c0_4 = arith.constant 0 : index
    %14 = vector.load %arg2[%c0_3, %c0_4] : memref<14x768xf32, #tpu.memory_space<vmem>>, vector<14x768xf32>
    %cst = arith.constant dense<0.000000e+00> : vector<16x768xf32>
    %15 = tpu.matmul %13, %14, %cst {dimension_numbers = #tpu.dot_dimension_numbers<[1], [0], [0], [1], [0, 0, 1, 1], [], []>} : vector<16x14xf32>, vector<14x768xf32>, vector<16x768xf32> -> vector<16x768xf32>
    %cst_5 = arith.constant dense<0.000000e+00> : vector<16xf32>
    %16 = vector.multi_reduction <add>, %15, %cst_5 [1] : vector<16x768xf32> to vector<16xf32>
    %17 = vector.shape_cast %16 : vector<16xf32> to vector<16x1xf32>
    %cst_6 = arith.constant 0.00130208337 : f32
    %18 = vector.broadcast %cst_6 : f32 to vector<16x1xf32>
    %19 = arith.mulf %17, %18 : vector<16x1xf32>
    %20 = vector.broadcast %19 : vector<16x1xf32> to vector<16x768xf32>
    %21 = arith.subf %15, %20 : vector<16x768xf32>
    %22 = arith.mulf %21, %21 : vector<16x768xf32>
    %cst_7 = arith.constant dense<0.000000e+00> : vector<16xf32>
    %23 = vector.multi_reduction <add>, %22, %cst_7 [1] : vector<16x768xf32> to vector<16xf32>
    %24 = vector.shape_cast %23 : vector<16xf32> to vector<16x1xf32>
    %cst_8 = arith.constant 0.00130208337 : f32
    %25 = vector.broadcast %cst_8 : f32 to vector<16x1xf32>
    %26 = arith.mulf %24, %25 : vector<16x1xf32>
    %cst_9 = arith.constant 9.99999974E-6 : f32
    %27 = vector.broadcast %cst_9 : f32 to vector<16x1xf32>
    %28 = arith.addf %26, %27 : vector<16x1xf32>
    %29 = math.rsqrt %28 : vector<16x1xf32>
    %30 = vector.broadcast %29 : vector<16x1xf32> to vector<16x768xf32>
    %31 = arith.mulf %21, %30 : vector<16x768xf32>
    %c0_10 = arith.constant 0 : index
    %c0_11 = arith.constant 0 : index
    %32 = vector.load %arg3[%c0_10, %c0_11] : memref<1x768xf32, #tpu.memory_space<vmem>>, vector<1x768xf32>
    %33 = vector.broadcast %32 : vector<1x768xf32> to vector<16x768xf32>
    %34 = arith.mulf %31, %33 : vector<16x768xf32>
    %c0_12 = arith.constant 0 : index
    %c0_13 = arith.constant 0 : index
    %35 = vector.load %arg4[%c0_12, %c0_13] : memref<1x768xf32, #tpu.memory_space<vmem>>, vector<1x768xf32>
    %36 = vector.broadcast %35 : vector<1x768xf32> to vector<16x768xf32>
    %37 = arith.addf %34, %36 : vector<16x768xf32>
    %c0_14 = arith.constant 0 : index
    %c0_15 = arith.constant 0 : index
    %38 = vector.load %arg5[%c0_14, %c0_15] : memref<16x768xf32, #tpu.memory_space<vmem>>, vector<16x768xf32>
    tpu.vector_store %arg5[%c0_14, %c0_15], %37 {strides = array<i32>} : memref<16x768xf32, #tpu.memory_space<vmem>>, vector<16x768xf32>,
    return
  }
  func.func @transform_0(%arg0: i32) -> (i32, i32) {
    %c0_i32 = arith.constant 0 : i32
    %c0_i32_0 = arith.constant 0 : i32
    return %arg0, %c0_i32 : i32, i32
  }
  func.func @transform_1(%arg0: i32) -> (i32, i32) {
    %c0_i32 = arith.constant 0 : i32
    %c0_i32_0 = arith.constant 0 : i32
    %c0_i32_1 = arith.constant 0 : i32
    return %c0_i32, %c0_i32_0 : i32, i32
  }
  func.func @transform_2(%arg0: i32) -> (i32, i32) {
    %c0_i32 = arith.constant 0 : i32
    %c0_i32_0 = arith.constant 0 : i32
    %c0_i32_1 = arith.constant 0 : i32
    return %c0_i32, %c0_i32_0 : i32, i32
  }
  func.func @transform_3(%arg0: i32) -> (i32, i32) {
    %c0_i32 = arith.constant 0 : i32
    %c0_i32_0 = arith.constant 0 : i32
    %c0_i32_1 = arith.constant 0 : i32
    return %c0_i32, %c0_i32_0 : i32, i32
  }
  func.func @transform_4(%arg0: i32) -> (i32, i32) {
    %c0_i32 = arith.constant 0 : i32
    %c0_i32_0 = arith.constant 0 : i32
    return %arg0, %c0_i32 : i32, i32
  }
}

</mosaic_0001>

<llo_original>
// kernel: tpu_custom_call.1
$region0: #{tpu_custom_call.1}
  #allocation0 [shape = 'u32[]', space=smem, size = 0x4, offset = 0x4, fixed_abs, tag = 'smem constant byte address 0x4 - core index']
  #allocation1 [shape = 'u32[144,128]{1,0:T(1,128)}', space=vmem, size = 0x12000, scoped, tag = 'internal scratch']
  %s0 = inlined_call_operand.vmem [shape: s32[16,3], index: 0, kind: input, shape index: {}]
  %s1 = inlined_call_operand.hbm [shape: f32[14,768], index: 1, kind: input, shape index: {}]
  %s2 = inlined_call_operand.vmem [shape: f32[1,768], index: 2, kind: input, shape index: {}]
  %s3 = inlined_call_operand.vmem [shape: f32[1,768], index: 3, kind: input, shape index: {}]
  %s4 = inlined_call_operand.hbm [shape: f32[16,768], index: 4, kind: output, shape index: {}]
  %s5 = sld [smem:[#allocation0]]
  $region30: #{tpu_custom_call.1} parent=0
    _
  %s7 = ssub.s32 1, %s5
  %s8 = scalar_select 0, %s7, %s5
  $region1: #{tpu_custom_call.1} parent=0
    #allocation2 [shape = 'u8[49152]{0}', space=vmem, size = 0xc000, scoped, tag = 'input window, operand 1, single buffered']
    #allocation3 [shape = 's32[1]{0}', space=sflag, size = 0x4, scoped, tag = 'scoped memory for tpu_custom_call.1']
    #allocation4 [shape = 's32[1]{0}', space=sflag, size = 0x4, scoped, tag = 'scoped memory for tpu_custom_call.1']
    #allocation5 [shape = 'u8[49152]{0}', space=vmem, size = 0xc000, scoped, tag = 'output window, operand 0, single buffered']
    %9 = vsyncpa [#allocation3], 0
    %10 = vsyncpa [#allocation4], 0
    // Predicated region
    $region2: #{tpu_custom_call.1} parent=1 // pred_check
      _
    $region3: #{tpu_custom_call.1} parent=1 // pred_check_branch
      %12 = sbr.rel (0) target = $region5
    $region4: #{tpu_custom_call.1} parent=1 // pred_region
      _
    $region5: #{tpu_custom_call.1} parent=1 // pred_fallthru
      _
    // Predicated region
    $region6: #{tpu_custom_call.1} parent=1 // pred_check
      _
    $region7: #{tpu_custom_call.1} parent=1 // pred_check_branch
      %14 = sbr.rel (0) target = $region9
    $region8: #{tpu_custom_call.1} parent=1 // pred_region
      %s16 = ssub.s32 1536, 1536
      %17 = vsyncadd [#allocation3], %s16
      %s18 = sshll.u32 [#allocation2], 4
      %s19 = int_to_ptr.vmem [resolvable:$true] %s18
      %24 = dma.hbm_to_vmem [thread:$0]  %s1, 1536, %s19, [#allocation3], 768, 768, 48
    $region9: #{tpu_custom_call.1} parent=1 // pred_fallthru
      _
    // Predicated region
    $region10: #{tpu_custom_call.1} parent=1 // pred_check
      _
    $region11: #{tpu_custom_call.1} parent=1 // pred_check_branch
      %26 = sbr.rel (0) target = $region13
    $region12: #{tpu_custom_call.1} parent=1 // pred_region
      _
    $region13: #{tpu_custom_call.1} parent=1 // pred_fallthru
      _
    // Predicated region
    $region14: #{tpu_custom_call.1} parent=1 // pred_check
      _
    $region15: #{tpu_custom_call.1} parent=1 // pred_check_branch
      %28 = sbr.rel (0) target = $region17
    $region16: #{tpu_custom_call.1} parent=1 // pred_region
      _
    $region17: #{tpu_custom_call.1} parent=1 // pred_fallthru
      _
    // Predicated region
    $region18: #{tpu_custom_call.1} parent=1 // pred_check
      _
    $region19: #{tpu_custom_call.1} parent=1 // pred_check_branch
      %30 = sbr.rel (0) target = $region21
    $region20: #{tpu_custom_call.1} parent=1 // pred_region
      %31 = dma.done [#allocation3], 1536
    $region21: #{tpu_custom_call.1} parent=1 // pred_fallthru
      _
    %v32 = vld [vmem:[%s0] sm:$0xff]
    %v33 = vld [vmem:[%s0 + $0x8] sm:$0xff]
    %v34 = vlaneseq
    %v35 = vand.u32 %v34, 127
    %36 = vset.pattern.permute.xlu0 0
    %37 = vperm.xlu0 %36, %v32
    %v38 = vpop.permute.xlu0 %37
    %39 = vset.pattern.permute.xlu0 0
    %40 = vperm.xlu0 %39, %v33
    %v41 = vpop.permute.xlu0 %40
    %vm42 = vcmp.eq.s32.totalorder %v35, %v38
    %vm43 = vcmp.eq.s32.totalorder %v35, %v41
    %44 = vset.pattern.permute.xlu0 1
    %45 = vperm.xlu0 %44, %v32
    %v46 = vpop.permute.xlu0 %45
    %47 = vset.pattern.permute.xlu0 1
    %48 = vperm.xlu0 %47, %v33
    %v49 = vpop.permute.xlu0 %48
    %vm50 = vcmp.eq.s32.totalorder %v35, %v46
    %vm51 = vcmp.eq.s32.totalorder %v35, %v49
    %vm52 = vmor %vm42, %vm50
    %vm53 = vmor %vm43, %vm51
    %54 = vset.pattern.permute.xlu0 2
    %55 = vperm.xlu0 %54, %v32
    %v56 = vpop.permute.xlu0 %55
    %57 = vset.pattern.permute.xlu0 2
    %58 = vperm.xlu0 %57, %v33
    %v59 = vpop.permute.xlu0 %58
    %vm60 = vcmp.eq.s32.totalorder %v35, %v56
    %vm61 = vcmp.eq.s32.totalorder %v35, %v59
    %vm62 = vmor %vm52, %vm60
    %vm63 = vmor %vm53, %vm61
    %v64 = vsel %vm62, 1, 0
    %v65 = vsel %vm63, 1, 0
    %v66 = vcvt.s32.f32 %v64
    %v67 = vcvt.s32.f32 %v65
    %v68 = vld [vmem:[#allocation2] sm:$0xff]
    %v69 = vld [vmem:[#allocation2 + $0x8] sm:$0xff]
    %v70 = vld [vmem:[#allocation2 + $0x10] sm:$0xff]
    %v71 = vld [vmem:[#allocation2 + $0x18] sm:$0xff]
    %v72 = vld [vmem:[#allocation2 + $0x20] sm:$0xff]
    %v73 = vld [vmem:[#allocation2 + $0x28] sm:$0xff]
    %v74 = vld [vmem:[#allocation2 + $0x30] sm:$0x3f]
    %v75 = vld [vmem:[#allocation2 + $0x38] sm:$0x3f]
    %v76 = vld [vmem:[#allocation2 + $0x40] sm:$0x3f]
    %v77 = vld [vmem:[#allocation2 + $0x48] sm:$0x3f]
    %v78 = vld [vmem:[#allocation2 + $0x50] sm:$0x3f]
    %v79 = vld [vmem:[#allocation2 + $0x58] sm:$0x3f]
    %vm80 = vcmask 113664
    %v82 = vsel %vm80, %v66, 0
    %v85 = vsel %vm80, %v67, 0
    %vm87 = vcmask 1045504
    %v89 = vsel %vm87, %v74, 0
    %v92 = vsel %vm87, %v75, 0
    %v95 = vsel %vm87, %v76, 0
    %v98 = vsel %vm87, %v77, 0
    %v101 = vsel %vm87, %v78, 0
    %v104 = vsel %vm87, %v79, 0
    %106 = vmatprep.subr.mxu0 %v69
    %107 = vmatpush1.msra.mxu0 %v68
    %108 = vmatprep.subr.mxu0 %v92
    %109 = vmatpush1.msra.mxu0 %v89
    %110 = vmatprep.subr.mxu0 0.0
    %111 = vmatpush1.msra.mxu0 0.0
    %112 = vmatprep.subr.mxu0 0.0
    %113 = vmatpush1.msra.mxu0 0.0
    %114 = vmatprep.subr.mxu0 0.0
    %115 = vmatpush1.msra.mxu0 0.0
    %116 = vmatprep.subr.mxu0 0.0
    %117 = vmatpush1.msra.mxu0 0.0
    %118 = vmatprep.subr.mxu0 0.0
    %119 = vmatpush1.msra.mxu0 0.0
    %120 = vmatprep.subr.mxu0 0.0
    %121 = vmatpush1.msra.mxu0 0.0
    %122 = vmatprep.subr.mxu0 0.0
    %123 = vmatpush1.msra.mxu0 0.0
    %124 = vmatprep.subr.mxu0 0.0
    %125 = vmatpush1.msra.mxu0 0.0
    %126 = vmatprep.subr.mxu0 0.0
    %127 = vmatpush1.msra.mxu0 0.0
    %128 = vmatprep.subr.mxu0 0.0
    %129 = vmatpush1.msra.mxu0 0.0
    %130 = vmatprep.subr.mxu0 0.0
    %131 = vmatpush1.msra.mxu0 0.0
    %132 = vmatprep.subr.mxu0 0.0
    %133 = vmatpush1.msra.mxu0 0.0
    %134 = vmatprep.subr.mxu0 0.0
    %135 = vmatpush1.msra.mxu0 0.0
    %136 = vmatprep.subr.mxu0 0.0
    %137 = vmatpush1.msra.mxu0 0.0
    %138 = vmatprep.subr.mxu0 0.0
    %139 = vmatpush1.msra.mxu0 0.0
    %140 = vmatprep.subr.mxu0 0.0
    %141 = vmatpush1.msra.mxu0 0.0
    %142 = vmatprep.subr.mxu0 0.0
    %143 = vmatpush1.msra.mxu0 0.0
    %144 = vmatprep.subr.mxu0 0.0
    %145 = vmatpush1.msra.mxu0 0.0
    %146 = vmatprep.subr.mxu0 0.0
    %147 = vmatpush1.msra.mxu0 0.0
    %148 = vmatprep.subr.mxu0 0.0
    %149 = vmatpush1.msra.mxu0 0.0
    %150 = vmatprep.subr.mxu0 0.0
    %151 = vmatpush1.msra.mxu0 0.0
    %152 = vmatprep.subr.mxu0 0.0
    %153 = vmatpush1.msra.mxu0 0.0
    %154 = vmatprep.subr.mxu0 0.0
    %155 = vmatpush1.msra.mxu0 0.0
    %156 = vmatprep.subr.mxu0 0.0
    %157 = vmatpush1.msra.mxu0 0.0
    %158 = vmatprep.subr.mxu0 0.0
    %159 = vmatpush1.msra.mxu0 0.0
    %160 = vmatprep.subr.mxu0 0.0
    %161 = vmatpush1.msra.mxu0 0.0
    %162 = vmatprep.subr.mxu0 0.0
    %163 = vmatpush1.msra.mxu0 0.0
    %164 = vmatprep.subr.mxu0 0.0
    %165 = vmatpush1.msra.mxu0 0.0
    %166 = vmatprep.subr.mxu0 0.0
    %167 = vmatpush1.msra.mxu0 0.0
    %168 = vmatprep.subr.mxu0 0.0
    %169 = vmatpush1.msra.mxu0 0.0
    %170 = vmatprep.mubr.f32.mxu0 0.0
    %171 = vmatmul.mubr.f32.gmra.mrb[0].mxu0 %v82
    %v172 = vpop.f32.mrb[0].mxu0
    %v173 = vadd.f32 0.0, %v172
    %v174 = vpop.f32.mrb[0].mxu0
    %v175 = vadd.f32 0.0, %v174
    %176 = vmatprep.mubr.f32.mxu0 0.0
    %177 = vmatmul.mubr.f32.gmra.mrb[0].mxu0 %v85
    %v178 = vpop.f32.mrb[0].mxu0
    %v179 = vadd.f32 0.0, %v178
    %v180 = vpop.f32.mrb[0].mxu0
    %v181 = vadd.f32 0.0, %v180
    %182 = vdwg.mxu0
    %183 = vmatprep.subr.mxu0 %v71
    %184 = vmatpush1.msra.mxu0 %v70
    %185 = vmatprep.subr.mxu0 %v98
    %186 = vmatpush1.msra.mxu0 %v95
    %187 = vmatprep.subr.mxu0 0.0
    %188 = vmatpush1.msra.mxu0 0.0
    %189 = vmatprep.subr.mxu0 0.0
    %190 = vmatpush1.msra.mxu0 0.0
    %191 = vmatprep.subr.mxu0 0.0
    %192 = vmatpush1.msra.mxu0 0.0
    %193 = vmatprep.subr.mxu0 0.0
    %194 = vmatpush1.msra.mxu0 0.0
    %195 = vmatprep.subr.mxu0 0.0
    %196 = vmatpush1.msra.mxu0 0.0
    %197 = vmatprep.subr.mxu0 0.0
    %198 = vmatpush1.msra.mxu0 0.0
    %199 = vmatprep.subr.mxu0 0.0
    %200 = vmatpush1.msra.mxu0 0.0
    %201 = vmatprep.subr.mxu0 0.0
    %202 = vmatpush1.msra.mxu0 0.0
    %203 = vmatprep.subr.mxu0 0.0
    %204 = vmatpush1.msra.mxu0 0.0
    %205 = vmatprep.subr.mxu0 0.0
    %206 = vmatpush1.msra.mxu0 0.0
    %207 = vmatprep.subr.mxu0 0.0
    %208 = vmatpush1.msra.mxu0 0.0
    %209 = vmatprep.subr.mxu0 0.0
    %210 = vmatpush1.msra.mxu0 0.0
    %211 = vmatprep.subr.mxu0 0.0
    %212 = vmatpush1.msra.mxu0 0.0
    %213 = vmatprep.subr.mxu0 0.0
    %214 = vmatpush1.msra.mxu0 0.0
    %215 = vmatprep.subr.mxu0 0.0
    %216 = vmatpush1.msra.mxu0 0.0
    %217 = vmatprep.subr.mxu0 0.0
    %218 = vmatpush1.msra.mxu0 0.0
    %219 = vmatprep.subr.mxu0 0.0
    %220 = vmatpush1.msra.mxu0 0.0
    %221 = vmatprep.subr.mxu0 0.0
    %222 = vmatpush1.msra.mxu0 0.0
    %223 = vmatprep.subr.mxu0 0.0
    %224 = vmatpush1.msra.mxu0 0.0
    %225 = vmatprep.subr.mxu0 0.0
    %226 = vmatpush1.msra.mxu0 0.0
    %227 = vmatprep.subr.mxu0 0.0
    %228 = vmatpush1.msra.mxu0 0.0
    %229 = vmatprep.subr.mxu0 0.0
    %230 = vmatpush1.msra.mxu0 0.0
    %231 = vmatprep.subr.mxu0 0.0
    %232 = vmatpush1.msra.mxu0 0.0
    %233 = vmatprep.subr.mxu0 0.0
    %234 = vmatpush1.msra.mxu0 0.0
    %235 = vmatprep.subr.mxu0 0.0
    %236 = vmatpush1.msra.mxu0 0.0
    %237 = vmatprep.subr.mxu0 0.0
    %238 = vmatpush1.msra.mxu0 0.0
    %239 = vmatprep.subr.mxu0 0.0
    %240 = vmatpush1.msra.mxu0 0.0
    %241 = vmatprep.subr.mxu0 0.0
    %242 = vmatpush1.msra.mxu0 0.0
    %243 = vmatprep.subr.mxu0 0.0
    %244 = vmatpush1.msra.mxu0 0.0
    %245 = vmatprep.subr.mxu0 0.0
    %246 = vmatpush1.msra.mxu0 0.0
    %247 = vmatprep.mubr.f32.mxu0 0.0
    %248 = vmatmul.mubr.f32.gmra.mrb[0].mxu0 %v82
    %v249 = vpop.f32.mrb[0].mxu0
    %v250 = vadd.f32 0.0, %v249
    %v251 = vpop.f32.mrb[0].mxu0
    %v252 = vadd.f32 0.0, %v251
    %253 = vmatprep.mubr.f32.mxu0 0.0
    %254 = vmatmul.mubr.f32.gmra.mrb[0].mxu0 %v85
    %v255 = vpop.f32.mrb[0].mxu0
    %v256 = vadd.f32 0.0, %v255
    %v257 = vpop.f32.mrb[0].mxu0
    %v258 = vadd.f32 0.0, %v257
    %259 = vdwg.mxu0
    %260 = vmatprep.subr.mxu0 %v73
    %261 = vmatpush1.msra.mxu0 %v72
    %262 = vmatprep.subr.mxu0 %v104
    %263 = vmatpush1.msra.mxu0 %v101
    %264 = vmatprep.subr.mxu0 0.0
    %265 = vmatpush1.msra.mxu0 0.0
    %266 = vmatprep.subr.mxu0 0.0
    %267 = vmatpush1.msra.mxu0 0.0
    %268 = vmatprep.subr.mxu0 0.0
    %269 = vmatpush1.msra.mxu0 0.0
    %270 = vmatprep.subr.mxu0 0.0
    %271 = vmatpush1.msra.mxu0 0.0
    %272 = vmatprep.subr.mxu0 0.0
    %273 = vmatpush1.msra.mxu0 0.0
    %274 = vmatprep.subr.mxu0 0.0
    %275 = vmatpush1.msra.mxu0 0.0
    %276 = vmatprep.subr.mxu0 0.0
    %277 = vmatpush1.msra.mxu0 0.0
    %278 = vmatprep.subr.mxu0 0.0
    %279 = vmatpush1.msra.mxu0 0.0
    %280 = vmatprep.subr.mxu0 0.0
    %281 = vmatpush1.msra.mxu0 0.0
    %282 = vmatprep.subr.mxu0 0.0
    %283 = vmatpush1.msra.mxu0 0.0
    %284 = vmatprep.subr.mxu0 0.0
    %285 = vmatpush1.msra.mxu0 0.0
    %286 = vmatprep.subr.mxu0 0.0
    %287 = vmatpush1.msra.mxu0 0.0
    %288 = vmatprep.subr.mxu0 0.0
    %289 = vmatpush1.msra.mxu0 0.0
    %290 = vmatprep.subr.mxu0 0.0
    %291 = vmatpush1.msra.mxu0 0.0
    %292 = vmatprep.subr.mxu0 0.0
    %293 = vmatpush1.msra.mxu0 0.0
    %294 = vmatprep.subr.mxu0 0.0
    %295 = vmatpush1.msra.mxu0 0.0
    %296 = vmatprep.subr.mxu0 0.0
    %297 = vmatpush1.msra.mxu0 0.0
    %298 = vmatprep.subr.mxu0 0.0
    %299 = vmatpush1.msra.mxu0 0.0
    %300 = vmatprep.subr.mxu0 0.0
    %301 = vmatpush1.msra.mxu0 0.0
    %302 = vmatprep.subr.mxu0 0.0
    %303 = vmatpush1.msra.mxu0 0.0
    %304 = vmatprep.subr.mxu0 0.0
    %305 = vmatpush1.msra.mxu0 0.0
    %306 = vmatprep.subr.mxu0 0.0
    %307 = vmatpush1.msra.mxu0 0.0
    %308 = vmatprep.subr.mxu0 0.0
    %309 = vmatpush1.msra.mxu0 0.0
    %310 = vmatprep.subr.mxu0 0.0
    %311 = vmatpush1.msra.mxu0 0.0
    %312 = vmatprep.subr.mxu0 0.0
    %313 = vmatpush1.msra.mxu0 0.0
    %314 = vmatprep.subr.mxu0 0.0
    %315 = vmatpush1.msra.mxu0 0.0
    %316 = vmatprep.subr.mxu0 0.0
    %317 = vmatpush1.msra.mxu0 0.0
    %318 = vmatprep.subr.mxu0 0.0
    %319 = vmatpush1.msra.mxu0 0.0
    %320 = vmatprep.subr.mxu0 0.0
    %321 = vmatpush1.msra.mxu0 0.0
    %322 = vmatprep.subr.mxu0 0.0
    %323 = vmatpush1.msra.mxu0 0.0
    %324 = vmatprep.mubr.f32.mxu0 0.0
    %325 = vmatmul.mubr.f32.gmra.mrb[0].mxu0 %v82
    %v326 = vpop.f32.mrb[0].mxu0
    %v327 = vadd.f32 0.0, %v326
    %v328 = vpop.f32.mrb[0].mxu0
    %v329 = vadd.f32 0.0, %v328
    %330 = vmatprep.mubr.f32.mxu0 0.0
    %331 = vmatmul.mubr.f32.gmra.mrb[0].mxu0 %v85
    %v332 = vpop.f32.mrb[0].mxu0
    %v333 = vadd.f32 0.0, %v332
    %v334 = vpop.f32.mrb[0].mxu0
    %v335 = vadd.f32 0.0, %v334
    %336 = vdwg.mxu0
    %v337 = vadd.f32 %v173, %v175
    %v338 = vadd.f32 %v337, %v250
    %v339 = vadd.f32 %v338, %v252
    %v340 = vadd.f32 %v339, %v327
    %v341 = vadd.f32 %v340, %v329
    %342 = vadd.xlane.f32.xlu0 %v341
    %v343 = vpop.xlane.xlu0 %342
    %v344 = vadd.f32 %v179, %v181
    %v345 = vadd.f32 %v344, %v256
    %v346 = vadd.f32 %v345, %v258
    %v347 = vadd.f32 %v346, %v333
    %v348 = vadd.f32 %v347, %v335
    %349 = vadd.xlane.f32.xlu0 %v348
    %v350 = vpop.xlane.xlu0 %349
    %v351 = vmul.f32 %v343, 0.0013020834
    %v352 = vmul.f32 %v350, 0.0013020834
    %v353 = vsub.f32 %v173, %v351
    %v354 = vsub.f32 %v175, %v351
    %v355 = vsub.f32 %v250, %v351
    %v356 = vsub.f32 %v252, %v351
    %v357 = vsub.f32 %v327, %v351
    %v358 = vsub.f32 %v329, %v351
    %v359 = vsub.f32 %v179, %v352
    %v360 = vsub.f32 %v181, %v352
    %v361 = vsub.f32 %v256, %v352
    %v362 = vsub.f32 %v258, %v352
    %v363 = vsub.f32 %v333, %v352
    %v364 = vsub.f32 %v335, %v352
    %v365 = vmul.f32 %v353, %v353
    %v366 = vmul.f32 %v354, %v354
    %v367 = vmul.f32 %v355, %v355
    %v368 = vmul.f32 %v356, %v356
    %v369 = vmul.f32 %v357, %v357
    %v370 = vmul.f32 %v358, %v358
    %v371 = vmul.f32 %v359, %v359
    %v372 = vmul.f32 %v360, %v360
    %v373 = vmul.f32 %v361, %v361
    %v374 = vmul.f32 %v362, %v362
    %v375 = vmul.f32 %v363, %v363
    %v376 = vmul.f32 %v364, %v364
    %v377 = vadd.f32 %v365, %v366
    %v378 = vadd.f32 %v377, %v367
    %v379 = vadd.f32 %v378, %v368
    %v380 = vadd.f32 %v379, %v369
    %v381 = vadd.f32 %v380, %v370
    %382 = vadd.xlane.f32.xlu0 %v381
    %v383 = vpop.xlane.xlu0 %382
    %v384 = vadd.f32 %v371, %v372
    %v385 = vadd.f32 %v384, %v373
    %v386 = vadd.f32 %v385, %v374
    %v387 = vadd.f32 %v386, %v375
    %v388 = vadd.f32 %v387, %v376
    %389 = vadd.xlane.f32.xlu0 %v388
    %v390 = vpop.xlane.xlu0 %389
    %v391 = vmul.f32 %v383, 0.0013020834
    %v392 = vmul.f32 %v390, 0.0013020834
    %v393 = vadd.f32 %v391, 1e-05
    %v394 = vadd.f32 %v392, 1e-05
    %v395 = vrsqrt.pop %v393
    %v396 = vrsqrt.pop %v394
    %v397 = vmul.f32 %v353, %v395
    %v398 = vmul.f32 %v354, %v395
    %v399 = vmul.f32 %v355, %v395
    %v400 = vmul.f32 %v356, %v395
    %v401 = vmul.f32 %v357, %v395
    %v402 = vmul.f32 %v358, %v395
    %v403 = vmul.f32 %v359, %v396
    %v404 = vmul.f32 %v360, %v396
    %v405 = vmul.f32 %v361, %v396
    %v406 = vmul.f32 %v362, %v396
    %v407 = vmul.f32 %v363, %v396
    %v408 = vmul.f32 %v364, %v396
    %v409 = vld [vmem:[%s2] sm:$0x3f]
    %v411 = vlaneseq
    %v412 = vshrl.u32 %v411, 7
    %v413 = vsub.s32 0, %v412
    %v414 = vrot.slane %v409, %v413
    %v415 = vlaneseq
    %v416 = vshrl.u32 %v415, 7
    %v417 = vsub.s32 1, %v416
    %v418 = vrot.slane %v409, %v417
    %v419 = vlaneseq
    %v420 = vshrl.u32 %v419, 7
    %v421 = vsub.s32 2, %v420
    %v422 = vrot.slane %v409, %v421
    %v423 = vlaneseq
    %v424 = vshrl.u32 %v423, 7
    %v425 = vsub.s32 3, %v424
    %v426 = vrot.slane %v409, %v425
    %v427 = vlaneseq
    %v428 = vshrl.u32 %v427, 7
    %v429 = vsub.s32 4, %v428
    %v430 = vrot.slane %v409, %v429
    %v431 = vlaneseq
    %v432 = vshrl.u32 %v431, 7
    %v433 = vsub.s32 5, %v432
    %v434 = vrot.slane %v409, %v433
    %v441 = vmul.f32 %v397, %v414
    %v442 = vmul.f32 %v398, %v418
    %v443 = vmul.f32 %v399, %v422
    %v444 = vmul.f32 %v400, %v426
    %v445 = vmul.f32 %v401, %v430
    %v446 = vmul.f32 %v402, %v434
    %v447 = vmul.f32 %v403, %v414
    %v448 = vmul.f32 %v404, %v418
    %v449 = vmul.f32 %v405, %v422
    %v450 = vmul.f32 %v406, %v426
    %v451 = vmul.f32 %v407, %v430
    %v452 = vmul.f32 %v408, %v434
    %v453 = vld [vmem:[%s3] sm:$0x3f]
    %v455 = vlaneseq
    %v456 = vshrl.u32 %v455, 7
    %v457 = vsub.s32 0, %v456
    %v458 = vrot.slane %v453, %v457
    %v459 = vlaneseq
    %v460 = vshrl.u32 %v459, 7
    %v461 = vsub.s32 1, %v460
    %v462 = vrot.slane %v453, %v461
    %v463 = vlaneseq
    %v464 = vshrl.u32 %v463, 7
    %v465 = vsub.s32 2, %v464
    %v466 = vrot.slane %v453, %v465
    %v467 = vlaneseq
    %v468 = vshrl.u32 %v467, 7
    %v469 = vsub.s32 3, %v468
    %v470 = vrot.slane %v453, %v469
    %v471 = vlaneseq
    %v472 = vshrl.u32 %v471, 7
    %v473 = vsub.s32 4, %v472
    %v474 = vrot.slane %v453, %v473
    %v475 = vlaneseq
    %v476 = vshrl.u32 %v475, 7
    %v477 = vsub.s32 5, %v476
    %v478 = vrot.slane %v453, %v477
    %v485 = vadd.f32 %v441, %v458
    %v486 = vadd.f32 %v442, %v462
    %v487 = vadd.f32 %v443, %v466
    %v488 = vadd.f32 %v444, %v470
    %v489 = vadd.f32 %v445, %v474
    %v490 = vadd.f32 %v446, %v478
    %v491 = vadd.f32 %v447, %v458
    %v492 = vadd.f32 %v448, %v462
    %v493 = vadd.f32 %v449, %v466
    %v494 = vadd.f32 %v450, %v470
    %v495 = vadd.f32 %v451, %v474
    %v496 = vadd.f32 %v452, %v478
    %497 = vst [vmem:[#allocation5] sm:$0xff] %v485
    %498 = vst [vmem:[#allocation5 + $0x8] sm:$0xff] %v486
    %499 = vst [vmem:[#allocation5 + $0x10] sm:$0xff] %v487
    %500 = vst [vmem:[#allocation5 + $0x18] sm:$0xff] %v488
    %501 = vst [vmem:[#allocation5 + $0x20] sm:$0xff] %v489
    %502 = vst [vmem:[#allocation5 + $0x28] sm:$0xff] %v490
    %503 = vst [vmem:[#allocation5 + $0x30] sm:$0xff] %v491
    %504 = vst [vmem:[#allocation5 + $0x38] sm:$0xff] %v492
    %505 = vst [vmem:[#allocation5 + $0x40] sm:$0xff] %v493
    %506 = vst [vmem:[#allocation5 + $0x48] sm:$0xff] %v494
    %507 = vst [vmem:[#allocation5 + $0x50] sm:$0xff] %v495
    %508 = vst [vmem:[#allocation5 + $0x58] sm:$0xff] %v496
    // Predicated region
    $region22: #{tpu_custom_call.1} parent=1 // pred_check
      _
    $region23: #{tpu_custom_call.1} parent=1 // pred_check_branch
      %510 = sbr.rel (0) target = $region25
    $region24: #{tpu_custom_call.1} parent=1 // pred_region
      %s512 = ssub.s32 1536, 1536
      %513 = vsyncadd [#allocation4], %s512
      %s514 = sshll.u32 [#allocation5], 4
      %s515 = int_to_ptr.vmem [resolvable:$true] %s514
      %520 = dma.vmem_to_hbm [thread:$0]  %s515, 1536, %s4, [#allocation4], 768, 768, 48
    $region25: #{tpu_custom_call.1} parent=1 // pred_fallthru
      _
    // Predicated region
    $region26: #{tpu_custom_call.1} parent=1 // pred_check
      _
    $region27: #{tpu_custom_call.1} parent=1 // pred_check_branch
      %522 = sbr.rel (0) target = $region29
    $region28: #{tpu_custom_call.1} parent=1 // pred_region
      %523 = dma.done [#allocation4], 1536
    $region29: #{tpu_custom_call.1} parent=1 // pred_fallthru
      _
    %524 = vsyncpa [#allocation3], 1
    %525 = vsyncpa [#allocation4], 1

</llo_original>
